<compile_context>
chip_gen: v7x
topology: tpu7x:2x2x1
jax: 0.10.0
libtpu: 0.0.40
codegen_flags: <defaults>
</compile_context>

<pallas_src>
import functools

import jax
import jax.numpy as jnp
from jax.experimental import pallas as pl
from jax.experimental.pallas import tpu as pltpu

_LANE = 128


def _nn1_kernel(src_ref, w1_ref, b1_ref, h1_ref):
    # src_ref: (1, Tn, C)  gather-source features (compute_dtype)
    # w1_ref:  (C, C)      nn1 weight (in x out, compute_dtype)
    # b1_ref:  (1, C)      nn1 bias (f32)
    # h1_ref:  (1, Tn, C)  relu(nn1(src)) tile (compute_dtype)
    h = jnp.dot(src_ref[0], w1_ref[...], preferred_element_type=jnp.float32)
    h1_ref[0] = jnp.maximum(h + b1_ref[...], 0.0).astype(h1_ref.dtype)


def _graphsage_kernel(x_ref, h1_ref, idx_ref, w2_ref, b2_ref, o_ref, *,
                      num_k, compute_dtype):
    # x_ref:   (1, Tn, C)   center-node features (compute_dtype)
    # h1_ref:  (1, Np, C)   relu(nn1(src)) for ALL nodes of this batch (compute_dtype)
    # idx_ref: (1, Tn, K)   neighbor indices for this node tile (int32)
    # w2_ref:  (2C, Cp)     fused nn2 weight (compute_dtype, lane-padded)
    # b2_ref:  (1, Cp)      nn2 bias (f32, lane-padded)
    # o_ref:   (1, Tn, Cp)  output tile (out dtype, lane-padded)
    n_total = h1_ref.shape[1]
    h1 = h1_ref[0]                                                     # (Np, C)
    idx = idx_ref[0]                                                   # (Tn, K)
    col = jax.lax.broadcasted_iota(jnp.int32, (1, n_total), 1)         # (1, Np)

    # Gather + running max over K neighbors, entirely in VMEM (one-hot MXU matmuls;
    # the (B, N, K, C) gathered tensor is never materialized in HBM).
    def gathered(k):
        onehot = (idx[:, k:k + 1] == col).astype(compute_dtype)        # (Tn, Np)
        return jnp.dot(onehot, h1, preferred_element_type=jnp.float32)  # (Tn, C) f32

    agg = gathered(0)
    for k in range(1, num_k):                  # K is small & static -> unrolled VPU maxes
        agg = jnp.maximum(agg, gathered(k))

    # Fused nn2 on cat([x, agg]): one (Tn, 2C) @ (2C, Cp) MXU pass.
    cat = jnp.concatenate([x_ref[0], agg.astype(compute_dtype)], axis=-1)
    out = jnp.dot(cat, w2_ref[...], preferred_element_type=jnp.float32) + b2_ref[...]
    o_ref[0] = jnp.maximum(out, 0.0).astype(o_ref.dtype)               # ReLU


def _choose_tiling(n, tile_n=None):
    """Returns (tile_n, padded_n); tile_n is a multiple of 8 and divides padded_n."""
    if tile_n is not None:
        t = -(-max(int(tile_n), 1) // 8) * 8
        return t, -(-n // t) * t
    for t in (512, 256, 128):
        if n % t == 0:
            return t, n
    if n > 128:                                 # e.g. ViG N=196 -> tiles of 128, pad to 256
        return 128, -(-n // 128) * 128
    t = -(-n // 8) * 8                          # small N: single padded tile
    return t, t


def _vmem_cap_bytes():
    try:
        return int(pltpu.get_tpu_info().vmem_capacity_bytes)
    except Exception:
        return 64 * 1024 * 1024                 # conservative (v7x per-TC VMEM)


def graphsage_forward(x_nchw, edge_index, params, y_nchw=None, *,
                      compute_dtype=jnp.bfloat16, tile_n=None):
    """x: (B, C, N, 1), edge_index: (2, B, N, K) int -> (B, Cout, N, 1)."""
    w1t, b1, w2t, b2 = params
    B, C, N, _ = x_nchw.shape
    K = edge_index.shape[-1]
    Cout = w2t.shape[-1]
    out_dtype = x_nchw.dtype

    tile, n_pad = _choose_tiling(N, tile_n)
    num_tiles = n_pad // tile

    # channels-last views + N padding (layout glue only; no neighbor gather in HBM)
    def to_bnc(a):
        a = jnp.transpose(a[..., 0], (0, 2, 1))                        # (B, N, C)
        if n_pad != N:
            a = jnp.pad(a, ((0, 0), (0, n_pad - N), (0, 0)))
        return a.astype(compute_dtype)

    x = to_bnc(x_nchw)
    src = x if y_nchw is None else to_bnc(y_nchw)

    idx = edge_index[0].astype(jnp.int32)                              # (B, N, K)
    if n_pad != N:
        idx = jnp.pad(idx, ((0, 0), (0, n_pad - N), (0, 0)))           # padded rows -> node 0

    # lane-dense output stores: pad Cout up to a multiple of 128, slice off below
    cout_p = -(-Cout // _LANE) * _LANE
    w2_p = jnp.pad(w2t, ((0, 0), (0, cout_p - Cout))) if cout_p != Cout else w2t
    b2_p = jnp.pad(b2, ((0, cout_p - Cout),)) if cout_p != Cout else b2

    w1c = w1t.astype(compute_dtype)
    w2c = w2_p.astype(compute_dtype)
    b1_2d = b1.reshape(1, C).astype(jnp.float32)
    b2_2d = b2_p.reshape(1, cout_p).astype(jnp.float32)

    bpe = jnp.dtype(compute_dtype).itemsize
    obpe = jnp.dtype(out_dtype).itemsize
    vmem_cap = _vmem_cap_bytes()

    # ---- step 1: h1 = relu(nn1(src)) once per node (nn1 commutes with the gather) ----
    h1 = pl.pallas_call(
        _nn1_kernel,
        out_shape=jax.ShapeDtypeStruct((B, n_pad, C), compute_dtype),
        grid=(B, num_tiles),
        in_specs=[pl.BlockSpec((1, tile, C), lambda b, n: (b, n, 0)),
                  pl.BlockSpec((C, C), lambda b, n: (0, 0)),
                  pl.BlockSpec((1, C), lambda b, n: (0, 0))],
        out_specs=pl.BlockSpec((1, tile, C), lambda b, n: (b, n, 0)),
        compiler_params=pltpu.CompilerParams(
            dimension_semantics=("parallel", "parallel")),
        cost_estimate=pl.CostEstimate(
            flops=int(B * n_pad * C * C * 2), transcendentals=0,
            bytes_accessed=int(2 * B * n_pad * C * bpe + C * C * bpe + C * 4)),
    )(src, w1c, b1_2d)

    # ---- step 2: in-VMEM one-hot gather + max over K + fused nn2 ----
    flops = (B * K * n_pad * n_pad * C * 2            # one-hot gather matmuls
             + B * n_pad * 2 * C * cout_p * 2)        # fused nn2
    bytes_accessed = int(2 * B * n_pad * C * bpe      # x tiles + h1
                         + B * n_pad * K * 4          # edge indices
                         + B * n_pad * cout_p * obpe  # output
                         + 2 * C * cout_p * bpe + cout_p * 4)
    cost = pl.CostEstimate(flops=int(flops), transcendentals=0,
                           bytes_accessed=bytes_accessed)

    # VMEM need: double-buffered blocks + one-hot / matmul transients headroom
    vmem_need = (2 * n_pad * C * bpe                      # h1 full-N block
                 + 2 * tile * C * bpe                     # x tile
                 + 2 * tile * K * 4                       # idx tile
                 + 2 * (2 * C * cout_p * bpe + cout_p * 4)  # w2 + b2
                 + 2 * tile * cout_p * obpe               # output tile
                 + tile * n_pad * bpe                     # one-hot transient
                 + 4 * tile * max(n_pad, cout_p, 2 * C) * 4)
    vmem_limit = int(min(max(2 * vmem_need, 32 * 1024 * 1024), vmem_cap * 3 // 4))

    kernel = functools.partial(_graphsage_kernel, num_k=K, compute_dtype=compute_dtype)

    out_bnc = pl.pallas_call(
        kernel,
        out_shape=jax.ShapeDtypeStruct((B, n_pad, cout_p), out_dtype),
        grid=(B, num_tiles),
        in_specs=[
            pl.BlockSpec((1, tile, C), lambda b, n: (b, n, 0)),     # x (per-tile)
            pl.BlockSpec((1, n_pad, C), lambda b, n: (b, 0, 0)),    # h1 (full-N, per-batch)
            pl.BlockSpec((1, tile, K), lambda b, n: (b, n, 0)),     # edge indices
            pl.BlockSpec((2 * C, cout_p), lambda b, n: (0, 0)),     # fused w2
            pl.BlockSpec((1, cout_p), lambda b, n: (0, 0)),         # b2
        ],
        out_specs=pl.BlockSpec((1, tile, cout_p), lambda b, n: (b, n, 0)),
        compiler_params=pltpu.CompilerParams(
            dimension_semantics=("parallel", "parallel"),
            vmem_limit_bytes=vmem_limit),
        cost_estimate=cost,
    )(x, h1, idx, w2c, b2_2d)

    out_bnc = out_bnc[:, :N, :Cout].astype(out_dtype)     # strip N / lane padding
    return jnp.transpose(out_bnc, (0, 2, 1))[..., None]   # back to (B, Cout, N, 1)


def graphsage_reference(x_nchw, edge_index, params, y_nchw=None):
    """Pure-JAX reference of the PyTorch forward, for validation."""
    w1t, b1, w2t, b2 = params
    x = jnp.transpose(x_nchw[..., 0], (0, 2, 1))                      # (B, N, C)
    src = x if y_nchw is None else jnp.transpose(y_nchw[..., 0], (0, 2, 1))
    idx = edge_index[0]
    xj = jax.vmap(lambda s, i: s[i])(src, idx)                        # (B, N, K, C)
    h = jnp.maximum(jnp.einsum('bnkc,cd->bnkd', xj, w1t) + b1, 0.0)   # nn1
    h = h.max(axis=2)                                                 # max over K
    cat = jnp.concatenate([x, h], axis=-1)                            # (B, N, 2C)
    out = jnp.maximum(jnp.einsum('bnc,cd->bnd', cat, w2t) + b2, 0.0)  # nn2
    return jnp.transpose(out, (0, 2, 1))[..., None]


if __name__ == "__main__":
    B, C, N, K = 2, 32, 64, 8
    Cout = 32

    key = jax.random.PRNGKey(0)
    k_x, k_idx, k_w1, k_b1, k_w2, k_b2 = jax.random.split(key, 6)

    x = jax.random.normal(k_x, (B, C, N, 1), dtype=jnp.float32)
    edge_index = jax.random.randint(k_idx, (2, B, N, K), 0, N, dtype=jnp.int32)

    w1t = jax.random.normal(k_w1, (C, C), dtype=jnp.float32) * (1.0 / jnp.sqrt(C))
    b1 = jax.random.normal(k_b1, (C,), dtype=jnp.float32) * 0.1
    w2t = jax.random.normal(k_w2, (2 * C, Cout), dtype=jnp.float32) * (1.0 / jnp.sqrt(2 * C))
    b2 = jax.random.normal(k_b2, (Cout,), dtype=jnp.float32) * 0.1
    params = (w1t, b1, w2t, b2)

    ref = jax.block_until_ready(graphsage_reference(x, edge_index, params))

    # default: bf16 MXU operands, f32 accumulation (looser tolerance)
    out = jax.block_until_ready(graphsage_forward(x, edge_index, params))
    assert out.shape == (B, Cout, N, 1), out.shape
    assert jnp.allclose(out, ref, atol=5e-2, rtol=5e-2), "bf16 kernel mismatch vs reference"

    # f32 operands (exact path)
    out_f32 = jax.block_until_ready(
        graphsage_forward(x, edge_index, params, compute_dtype=jnp.float32))
    assert jnp.allclose(out_f32, ref, atol=1e-3, rtol=1e-3), "f32 kernel mismatch"

    # multi-tile N with padding (tile=24 -> N padded 64->72), f32 path
    out_tiled = jax.block_until_ready(
        graphsage_forward(x, edge_index, params, compute_dtype=jnp.float32, tile_n=24))
    assert jnp.allclose(out_tiled, ref, atol=1e-3, rtol=1e-3), "tiled/padded kernel mismatch"

    # y path (gather from a second feature map), as in forward(x, edge_index, y)
    y = jax.random.normal(jax.random.PRNGKey(1), (B, C, N, 1), dtype=jnp.float32)
    out_y = jax.block_until_ready(
        graphsage_forward(x, edge_index, params, y_nchw=y, compute_dtype=jnp.float32))
    ref_y = graphsage_reference(x, edge_index, params, y_nchw=y)
    assert jnp.allclose(out_y, ref_y, atol=1e-3, rtol=1e-3), "y-path mismatch"

    print("KERNEL_OK")
</pallas_src>

<mosaic_0001>
module attributes {stable_mosaic.version = 11 : i64} {
  func.func @_nn1_kernel(%arg0: i32, %arg1: i32, %arg2: memref<1x64x32xbf16, #tpu.memory_space<vmem>>, %arg3: memref<32x32xbf16, #tpu.memory_space<vmem>>, %arg4: memref<1x32xf32, #tpu.memory_space<vmem>>, %arg5: memref<1x64x32xbf16, #tpu.memory_space<vmem>>) attributes {dimension_semantics = [#tpu.dimension_semantics<parallel>, #tpu.dimension_semantics<parallel>], iteration_bounds = array<i64: 2, 1>, scalar_prefetch = 0 : i64, scratch_operands = 0 : i64, tpu.core_type = #tpu.core_type<tc>, window_params = [{transform_indices = @transform_0, window_bounds = array<i64: 1, 64, 32>}, {pipeline_mode = #tpu.pipeline_mode<synchronous>, transform_indices = @transform_1, window_bounds = array<i64: 32, 32>}, {pipeline_mode = #tpu.pipeline_mode<synchronous>, transform_indices = @transform_2, window_bounds = array<i64: 1, 32>}, {transform_indices = @transform_3, window_bounds = array<i64: 1, 64, 32>}]} {
    %c0 = arith.constant 0 : index
    %c0_0 = arith.constant 0 : index
    %c0_1 = arith.constant 0 : index
    %0 = vector.load %arg2[%c0, %c0_0, %c0_1] : memref<1x64x32xbf16, #tpu.memory_space<vmem>>, vector<1x64x32xbf16>
    %1 = vector.shape_cast %0 : vector<1x64x32xbf16> to vector<64x32xbf16>
    %c0_2 = arith.constant 0 : index
    %c0_3 = arith.constant 0 : index
    %2 = vector.load %arg3[%c0_2, %c0_3] : memref<32x32xbf16, #tpu.memory_space<vmem>>, vector<32x32xbf16>
    %cst = arith.constant dense<0.000000e+00> : vector<64x32xf32>
    %3 = tpu.matmul %1, %2, %cst {dimension_numbers = #tpu.dot_dimension_numbers<[1], [0], [0], [1], [0, 0, 1, 1], [], []>} : vector<64x32xbf16>, vector<32x32xbf16>, vector<64x32xf32> -> vector<64x32xf32>
    %c0_4 = arith.constant 0 : index
    %c0_5 = arith.constant 0 : index
    %4 = vector.load %arg4[%c0_4, %c0_5] : memref<1x32xf32, #tpu.memory_space<vmem>>, vector<1x32xf32>
    %5 = vector.broadcast %4 : vector<1x32xf32> to vector<64x32xf32>
    %6 = arith.addf %3, %5 : vector<64x32xf32>
    %cst_6 = arith.constant 0.000000e+00 : f32
    %7 = vector.broadcast %cst_6 : f32 to vector<64x32xf32>
    %8 = arith.maximumf %6, %7 : vector<64x32xf32>
    %9 = arith.truncf %8 : vector<64x32xf32> to vector<64x32xbf16>
    %c0_7 = arith.constant 0 : index
    %c0_8 = arith.constant 0 : index
    %c0_9 = arith.constant 0 : index
    %10 = vector.load %arg5[%c0_7, %c0_8, %c0_9] : memref<1x64x32xbf16, #tpu.memory_space<vmem>>, vector<1x64x32xbf16>
    %11 = vector.shape_cast %10 : vector<1x64x32xbf16> to vector<64x32xbf16>
    %12 = vector.shape_cast %9 : vector<64x32xbf16> to vector<1x64x32xbf16>
    tpu.vector_store %arg5[%c0_7, %c0_8, %c0_9], %12 {strides = array<i32>} : memref<1x64x32xbf16, #tpu.memory_space<vmem>>, vector<1x64x32xbf16>,
    return
  }
  func.func @transform_0(%arg0: i32, %arg1: i32) -> (i32, i32, i32) {
    %c0_i32 = arith.constant 0 : i32
    %c0_i32_0 = arith.constant 0 : i32
    return %arg0, %arg1, %c0_i32 : i32, i32, i32
  }
  func.func @transform_1(%arg0: i32, %arg1: i32) -> (i32, i32) {
    %c0_i32 = arith.constant 0 : i32
    %c0_i32_0 = arith.constant 0 : i32
    %c0_i32_1 = arith.constant 0 : i32
    return %c0_i32, %c0_i32_0 : i32, i32
  }
  func.func @transform_2(%arg0: i32, %arg1: i32) -> (i32, i32) {
    %c0_i32 = arith.constant 0 : i32
    %c0_i32_0 = arith.constant 0 : i32
    %c0_i32_1 = arith.constant 0 : i32
    return %c0_i32, %c0_i32_0 : i32, i32
  }
  func.func @transform_3(%arg0: i32, %arg1: i32) -> (i32, i32, i32) {
    %c0_i32 = arith.constant 0 : i32
    %c0_i32_0 = arith.constant 0 : i32
    return %arg0, %arg1, %c0_i32 : i32, i32, i32
  }
}

</mosaic_0001>

<llo_original>
// kernel: tpu_custom_call.1
$region0: #{tpu_custom_call.1}
  #allocation0 [shape = 'u32[]', space=smem, size = 0x4, offset = 0x4, fixed_abs, tag = 'smem constant byte address 0x4 - core index']
  #allocation1 [shape = 'u32[144,128]{1,0:T(1,128)}', space=vmem, size = 0x12000, scoped, tag = 'internal scratch']
  %s0 = inlined_call_operand.vmem [shape: bf16[2,64,32], index: 0, kind: input, shape index: {}]
  %s1 = inlined_call_operand.vmem [shape: bf16[32,32], index: 1, kind: input, shape index: {}]
  %s2 = inlined_call_operand.vmem [shape: f32[1,32], index: 2, kind: input, shape index: {}]
  %s3 = inlined_call_operand.vmem [shape: bf16[2,64,32], index: 3, kind: output, shape index: {}]
  %s4 = sld [smem:[#allocation0]]
  $region45: #{tpu_custom_call.1} parent=0
    _
  %s6 = ssub.s32 1, %s4
  %s7 = scalar_select 0, %s6, %s4
  loop: start=0, step=1, limit=4
  $region2: #{tpu_custom_call.1} parent=0 // loop_pre_header
    _
  $region3: #{tpu_custom_call.1} parent=0 // loop_header
    %s9 = sphi 0, %s13
    %p10 = scmp.ge.s32.totalorder %s9, 4
    %s16 = sphi 0, %s28
    %s17 = sphi 0, %s24
    %s18 = sphi 0, %s16
    %s19 = sphi 0, %s17
    %s20 = sphi 0, %s18
    %s21 = sphi 0, %s19
    %s33 = sphi 0, %s35
    %s36 = sphi 0, %s33
    %s37 = sphi 0, %s36
    %s53 = sphi 0, %s37
    %s57 = sphi 0, %s57
    %s59 = sphi 0, %s57
    %s60 = sphi 0, %s59
    %s74 = sphi 0, %s60
    %s78 = sphi 0, %s78
    %s80 = sphi 0, %s78
    %s81 = sphi 0, %s80
    %s95 = sphi 0, %s81
    %s103 = sphi 0, %s105
    %s106 = sphi 0, %s103
    %s107 = sphi 0, %s106
    %s123 = sphi 0, %s107
  $region4: #{tpu_custom_call.1} parent=0 // loop_header_branch
    %12 = sbr.rel (%p10) target = $region8
  $region5: #{tpu_custom_call.1} parent=0 // loop_body
    %s14 = ssub.s32 %s9, 1
    %s15 = ssub.s32 %s9, 2
    %s22 = sadd.s32 1, %s17
    %p23 = scmp.ge.s32.totalorder %s22, 1
    %s24 = scalar_select %p23, 0, %s22
    %s25 = sadd.s32 1, %s16
    %s26 = scalar_select %p23, %s25, %s16
    %p27 = scmp.ge.s32.totalorder %s26, 2
    %s28 = scalar_select %p27, 0, %s26
    %s29 = ssub.s32 %s16, %s28
    %s30 = ssub.s32 %s17, %s24
    %s31 = sor.u32 %s29, %s30
    %p32 = scmp.eq.s32.totalorder %s31, 0
    %s34 = sadd.s32 %s33, 1
    %s35 = scalar_select %p32, %s33, %s34
    %p38 = pneg %p32
    %p39 = scmp.eq.s32.totalorder %s9, 1
    %p40 = por %p38, %p39
    %p41 = scmp.ne.s32.totalorder %s33, %s36
    %p42 = scmp.eq.s32.totalorder %s9, 0
    %p43 = por %p41, %p42
    %p44 = scmp.ne.s32.totalorder %s33, %s36
    %p45 = scmp.eq.s32.totalorder %s14, 1
    %p46 = por %p44, %p45
    %p47 = scmp.ne.s32.totalorder %s36, %s37
    %p48 = scmp.eq.s32.totalorder %s14, 0
    %p49 = por %p47, %p48
    %p50 = scmp.ne.s32.totalorder %s36, %s37
    %p51 = scmp.eq.s32.totalorder %s15, 1
    %p52 = por %p50, %p51
    %p54 = scmp.ne.s32.totalorder %s37, %s53
    %p55 = scmp.eq.s32.totalorder %s15, 0
    %p56 = por %p54, %p55
    %s58 = sadd.s32 %s57, 1
    %p61 = scmp.eq.s32.totalorder %s9, 1
    %p62 = scmp.ne.s32.totalorder %s57, %s59
    %p63 = scmp.eq.s32.totalorder %s9, 0
    %p64 = por %p62, %p63
    %p65 = scmp.ne.s32.totalorder %s57, %s59
    %p66 = scmp.eq.s32.totalorder %s14, 1
    %p67 = por %p65, %p66
    %p68 = scmp.ne.s32.totalorder %s59, %s60
    %p69 = scmp.eq.s32.totalorder %s14, 0
    %p70 = por %p68, %p69
    %p71 = scmp.ne.s32.totalorder %s59, %s60
    %p72 = scmp.eq.s32.totalorder %s15, 1
    %p73 = por %p71, %p72
    %p75 = scmp.ne.s32.totalorder %s60, %s74
    %p76 = scmp.eq.s32.totalorder %s15, 0
    %p77 = por %p75, %p76
    %s79 = sadd.s32 %s78, 1
    %p82 = scmp.eq.s32.totalorder %s9, 1
    %p83 = scmp.ne.s32.totalorder %s78, %s80
    %p84 = scmp.eq.s32.totalorder %s9, 0
    %p85 = por %p83, %p84
    %p86 = scmp.ne.s32.totalorder %s78, %s80
    %p87 = scmp.eq.s32.totalorder %s14, 1
    %p88 = por %p86, %p87
    %p89 = scmp.ne.s32.totalorder %s80, %s81
    %p90 = scmp.eq.s32.totalorder %s14, 0
    %p91 = por %p89, %p90
    %p92 = scmp.ne.s32.totalorder %s80, %s81
    %p93 = scmp.eq.s32.totalorder %s15, 1
    %p94 = por %p92, %p93
    %p96 = scmp.ne.s32.totalorder %s81, %s95
    %p97 = scmp.eq.s32.totalorder %s15, 0
    %p98 = por %p96, %p97
    %s99 = ssub.s32 %s16, %s28
    %s100 = ssub.s32 %s17, %s24
    %s101 = sor.u32 %s99, %s100
    %p102 = scmp.eq.s32.totalorder %s101, 0
    %s104 = sadd.s32 %s103, 1
    %s105 = scalar_select %p102, %s103, %s104
    %p108 = pneg %p102
    %p109 = scmp.eq.s32.totalorder %s9, 1
    %p110 = por %p108, %p109
    %p111 = scmp.ne.s32.totalorder %s103, %s106
    %p112 = scmp.eq.s32.totalorder %s9, 0
    %p113 = por %p111, %p112
    %p114 = scmp.ne.s32.totalorder %s103, %s106
    %p115 = scmp.eq.s32.totalorder %s14, 1
    %p116 = por %p114, %p115
    %p117 = scmp.ne.s32.totalorder %s106, %s107
    %p118 = scmp.eq.s32.totalorder %s14, 0
    %p119 = por %p117, %p118
    %p120 = scmp.ne.s32.totalorder %s106, %s107
    %p121 = scmp.eq.s32.totalorder %s15, 1
    %p122 = por %p120, %p121
    %p124 = scmp.ne.s32.totalorder %s107, %s123
    %p125 = scmp.eq.s32.totalorder %s15, 0
    %p126 = por %p124, %p125
    %p127 = scmp.le.s32.totalorder 1, %s9
    %p128 = scmp.lt.s32.totalorder %s9, 3
    %p129 = pnand %p127, %p128
    %p130 = pneg %p129
    // Predicated region
    $region9: #{tpu_custom_call.1} parent=5 // pred_check
      _
    $region10: #{tpu_custom_call.1} parent=5 // pred_check_branch
      %132 = sbr.rel (%p129) target = $region12
    $region11: #{tpu_custom_call.1} parent=5 // pred_region
      %s133 = ssub.s32 %s9, 1
      // Predicated region
      $region13: #{tpu_custom_call.1} parent=11 // pred_check
        %p134 = pneg %p70
      $region14: #{tpu_custom_call.1} parent=11 // pred_check_branch
        %136 = sbr.rel (%p134) target = $region16
      $region15: #{tpu_custom_call.1} parent=11 // pred_region
        _
      $region16: #{tpu_custom_call.1} parent=11 // pred_fallthru
        _
      // Predicated region
      $region17: #{tpu_custom_call.1} parent=11 // pred_check
        %p137 = pneg %p91
      $region18: #{tpu_custom_call.1} parent=11 // pred_check_branch
        %139 = sbr.rel (%p137) target = $region20
      $region19: #{tpu_custom_call.1} parent=11 // pred_region
        _
      $region20: #{tpu_custom_call.1} parent=11 // pred_fallthru
        _
    $region12: #{tpu_custom_call.1} parent=5 // pred_fallthru
      _
    %p140 = scmp.lt.s32.totalorder %s9, 2
    // Predicated region
    $region21: #{tpu_custom_call.1} parent=5 // pred_check
      %p141 = pneg %p140
    $region22: #{tpu_custom_call.1} parent=5 // pred_check_branch
      %143 = sbr.rel (%p141) target = $region24
    $region23: #{tpu_custom_call.1} parent=5 // pred_region
      // Predicated region
      $region25: #{tpu_custom_call.1} parent=23 // pred_check
        %p144 = pneg %p43
      $region26: #{tpu_custom_call.1} parent=23 // pred_check_branch
        %146 = sbr.rel (%p144) target = $region28
      $region27: #{tpu_custom_call.1} parent=23 // pred_region
        %s147 = smul.u32 8, %s17
        %p148 = scmp.lt.s32.totalorder %s16, 1
        %s149 = scalar_select %p148, %s16, 1
        %p150 = scmp.lt.s32.totalorder %s147, 7
        %s151 = scalar_select %p150, %s147, 7
        %s152 = smul.addr %s149, 8
        %s153 = sadd.s32 %s151, %s152
        %s154 = smul.addr %s153, 4
        %s155 = scalar_lea.vmem %s0, %s154
        %s156 = smul.u32 8, %s17
      $region28: #{tpu_custom_call.1} parent=23 // pred_fallthru
        _
    $region24: #{tpu_custom_call.1} parent=5 // pred_fallthru
      _
    %p157 = scmp.le.s32.totalorder 1, %s9
    %p158 = scmp.lt.s32.totalorder %s9, 3
    %p159 = pnand %p157, %p158
    %p160 = pneg %p159
    // Predicated region
    $region29: #{tpu_custom_call.1} parent=5 // pred_check
      _
    $region30: #{tpu_custom_call.1} parent=5 // pred_check_branch
      %162 = sbr.rel (%p159) target = $region32
    $region31: #{tpu_custom_call.1} parent=5 // pred_region
      %s163 = ssub.s32 %s9, 1
      %s164 = smul.u32 8, %s19
      %p165 = scmp.lt.s32.totalorder %s18, 1
      %s166 = scalar_select %p165, %s18, 1
      %p167 = scmp.lt.s32.totalorder %s164, 7
      %s168 = scalar_select %p167, %s164, 7
      %s169 = smul.addr %s166, 8
      %s170 = sadd.s32 %s168, %s169
      %s171 = smul.addr %s170, 4
      %s172 = scalar_lea.vmem %s0, %s171
      %p173 = pneg %p49
      %p174 = pneg %p46
      %p175 = pneg %p70
      %p176 = pneg %p67
      %p177 = pneg %p91
      %p178 = pneg %p88
      %p179 = pneg %p119
      %p180 = pneg %p116
      %s181 = smul.u32 8, %s19
      %p182 = scmp.lt.s32.totalorder %s18, 1
      %s183 = scalar_select %p182, %s18, 1
      %p184 = scmp.lt.s32.totalorder %s181, 7
      %s185 = scalar_select %p184, %s181, 7
      %s186 = smul.addr %s183, 8
      %s187 = sadd.s32 %s185, %s186
      %s188 = smul.addr %s187, 4
      %s189 = scalar_lea.vmem %s3, %s188
      %s190 = smul.u32 8, %s19
      %p191 = scmp.lt.s32.totalorder %s18, 1
      %s192 = scalar_select %p191, %s18, 1
      %p193 = scmp.lt.s32.totalorder %s190, 7
      %s194 = scalar_select %p193, %s190, 7
      %s195 = smul.addr %s192, 8
      %s196 = sadd.s32 %s194, %s195
      %s197 = smul.addr %s196, 4
      %s198 = scalar_lea.vmem %s0, %s197
      %s199 = smul.u32 8, %s19
      %s200 = smul.u32 8, %s19
      %p201 = scmp.lt.s32.totalorder %s18, 1
      %s202 = scalar_select %p201, %s18, 1
      %p203 = scmp.lt.s32.totalorder %s200, 7
      %s204 = scalar_select %p203, %s200, 7
      %s205 = smul.addr %s202, 8
      %s206 = sadd.s32 %s204, %s205
      %s207 = smul.addr %s206, 4
      %s208 = scalar_lea.vmem %s3, %s207
      %s209 = smul.u32 8, %s19
      %v211 = vld [vmem:[%s198] sm:$0xf]
      %v212 = vld [vmem:[%s198 + $0x4] sm:$0xf]
      %v213 = vld [vmem:[%s198 + $0x8] sm:$0xf]
      %v214 = vld [vmem:[%s198 + $0xc] sm:$0xf]
      %v215 = vld [vmem:[%s198 + $0x10] sm:$0xf]
      %v216 = vld [vmem:[%s198 + $0x14] sm:$0xf]
      %v217 = vld [vmem:[%s198 + $0x18] sm:$0xf]
      %v218 = vld [vmem:[%s198 + $0x1c] sm:$0xf]
      %v219 = vld [vmem:[%s1] sm:$0xf]
      %v220 = vld [vmem:[%s1 + $0x4] sm:$0xf]
      %v221 = vld [vmem:[%s1 + $0x8] sm:$0xf]
      %v222 = vld [vmem:[%s1 + $0xc] sm:$0xf]
      %v223 = vld [vmem:[%s2] sm:$0x1]
      %v225 = vlaneseq
      %v226 = vshrl.u32 %v225, 7
      %v227 = vsub.s32 0, %v226
      %v228 = vrot.slane %v223, %v227
      %v238 = vunpack.c.l.b16 %v211
      %v239 = vunpack.c.l.b16 %v212
      %v240 = vunpack.c.l.b16 %v213
      %v241 = vunpack.c.l.b16 %v214
      %v242 = vunpack.c.l.b16 %v215
      %v243 = vunpack.c.l.b16 %v216
      %v244 = vunpack.c.l.b16 %v217
      %v245 = vunpack.c.l.b16 %v218
      %v246 = vpack.c.b16 %v239, %v238
      %v247 = vpack.c.b16 %v241, %v240
      %v248 = vpack.c.b16 %v243, %v242
      %v249 = vpack.c.b16 %v245, %v244
      %v254 = vunpack.c.l.b16 %v219
      %v255 = vunpack.c.l.b16 %v220
      %v256 = vunpack.c.l.b16 %v221
      %v257 = vunpack.c.l.b16 %v222
      %v258 = vpack.c.b16 %v255, %v254
      %v259 = vpack.c.b16 %v257, %v256
      %vm262 = vcmask 261120
      %v264 = vsel %vm262, %v246, 0
      %v267 = vsel %vm262, %v247, 0
      %v270 = vsel %vm262, %v248, 0
      %v273 = vsel %vm262, %v249, 0
      %275 = vmatprep.subr.bf16.mxu0 0
      %276 = vmatpush1.bf16.msra.mxu0 %v258
      %277 = vmatprep.subr.bf16.mxu0 0
      %278 = vmatpush1.bf16.msra.mxu0 %v259
      %279 = vmatprep.subr.bf16.mxu0 0
      %280 = vmatpush1.bf16.msra.mxu0 0
      %281 = vmatprep.subr.bf16.mxu0 0
      %282 = vmatpush1.bf16.msra.mxu0 0
      %283 = vmatprep.subr.bf16.mxu0 0
      %284 = vmatpush1.bf16.msra.mxu0 0
      %285 = vmatprep.subr.bf16.mxu0 0
      %286 = vmatpush1.bf16.msra.mxu0 0
      %287 = vmatprep.subr.bf16.mxu0 0
      %288 = vmatpush1.bf16.msra.mxu0 0
      %289 = vmatprep.subr.bf16.mxu0 0
      %290 = vmatpush1.bf16.msra.mxu0 0
      %291 = vmatprep.subr.bf16.mxu0 0
      %292 = vmatpush1.bf16.msra.mxu0 0
      %293 = vmatprep.subr.bf16.mxu0 0
      %294 = vmatpush1.bf16.msra.mxu0 0
      %295 = vmatprep.subr.bf16.mxu0 0
      %296 = vmatpush1.bf16.msra.mxu0 0
      %297 = vmatprep.subr.bf16.mxu0 0
      %298 = vmatpush1.bf16.msra.mxu0 0
      %299 = vmatprep.subr.bf16.mxu0 0
      %300 = vmatpush1.bf16.msra.mxu0 0
      %301 = vmatprep.subr.bf16.mxu0 0
      %302 = vmatpush1.bf16.msra.mxu0 0
      %303 = vmatprep.subr.bf16.mxu0 0
      %304 = vmatpush1.bf16.msra.mxu0 0
      %305 = vmatprep.subr.bf16.mxu0 0
      %306 = vmatpush1.bf16.msra.mxu0 0
      %307 = vmatprep.mubr.bf16.mxu0 0
      %308 = vmatmul.mubr.bf16.gmra.mrb[0].mxu0 %v264
      %v309 = vpop.f32.mrb[0].mxu0
      %v310 = vadd.f32 %v228, %v309
      %v311 = vpop.f32.mrb[0].mxu0
      %v312 = vpop.f32.mrb[0].mxu0
      %v313 = vadd.f32 %v228, %v312
      %v314 = vpop.f32.mrb[0].mxu0
      %315 = vmatprep.mubr.bf16.mxu0 0
      %316 = vmatmul.mubr.bf16.gmra.mrb[0].mxu0 %v267
      %v317 = vpop.f32.mrb[0].mxu0
      %v318 = vadd.f32 %v228, %v317
      %v319 = vpop.f32.mrb[0].mxu0
      %v320 = vpop.f32.mrb[0].mxu0
      %v321 = vadd.f32 %v228, %v320
      %v322 = vpop.f32.mrb[0].mxu0
      %323 = vmatprep.mubr.bf16.mxu0 0
      %324 = vmatmul.mubr.bf16.gmra.mrb[0].mxu0 %v270
      %v325 = vpop.f32.mrb[0].mxu0
      %v326 = vadd.f32 %v228, %v325
      %v327 = vpop.f32.mrb[0].mxu0
      %v328 = vpop.f32.mrb[0].mxu0
      %v329 = vadd.f32 %v228, %v328
      %v330 = vpop.f32.mrb[0].mxu0
      %331 = vmatprep.mubr.bf16.mxu0 0
      %332 = vmatmul.mubr.bf16.gmra.mrb[0].mxu0 %v273
      %v333 = vpop.f32.mrb[0].mxu0
      %v334 = vadd.f32 %v228, %v333
      %v335 = vpop.f32.mrb[0].mxu0
      %v336 = vpop.f32.mrb[0].mxu0
      %v337 = vadd.f32 %v228, %v336
      %v338 = vpop.f32.mrb[0].mxu0
      %339 = vdwg.mxu0
      %v340 = vmax.f32 %v310, 0.0
      %v341 = vmax.f32 %v313, 0.0
      %v342 = vmax.f32 %v318, 0.0
      %v343 = vmax.f32 %v321, 0.0
      %v344 = vmax.f32 %v326, 0.0
      %v345 = vmax.f32 %v329, 0.0
      %v346 = vmax.f32 %v334, 0.0
      %v347 = vmax.f32 %v337, 0.0
      %v348 = vpack.c.bf16 %v341, %v340
      %v349 = vpack.c.bf16 %v343, %v342
      %v350 = vpack.c.bf16 %v345, %v344
      %v351 = vpack.c.bf16 %v347, %v346
      %v356 = vunpack.c.l.b16 %v348
      %v357 = vunpack.c.h.b16 %v348
      %v358 = vunpack.c.l.b16 %v349
      %v359 = vunpack.c.h.b16 %v349
      %v360 = vunpack.c.l.b16 %v350
      %v361 = vunpack.c.h.b16 %v350
      %v362 = vunpack.c.l.b16 %v351
      %v363 = vunpack.c.h.b16 %v351
      %v364 = vpack.c.b16 %v356, %v356
      %v365 = vpack.c.b16 %v357, %v357
      %v366 = vpack.c.b16 %v358, %v358
      %v367 = vpack.c.b16 %v359, %v359
      %v368 = vpack.c.b16 %v360, %v360
      %v369 = vpack.c.b16 %v361, %v361
      %v370 = vpack.c.b16 %v362, %v362
      %v371 = vpack.c.b16 %v363, %v363
      %vm380 = vcmask 257024
      %381 = vst.msk [vmem:[%s208] sm:$0xf] %vm380, %v364
      %382 = vst.msk [vmem:[%s208 + $0x4] sm:$0xf] %vm380, %v365
      %383 = vst.msk [vmem:[%s208 + $0x8] sm:$0xf] %vm380, %v366
      %384 = vst.msk [vmem:[%s208 + $0xc] sm:$0xf] %vm380, %v367
      %385 = vst.msk [vmem:[%s208 + $0x10] sm:$0xf] %vm380, %v368
      %386 = vst.msk [vmem:[%s208 + $0x14] sm:$0xf] %vm380, %v369
      %387 = vst.msk [vmem:[%s208 + $0x18] sm:$0xf] %vm380, %v370
      %388 = vst.msk [vmem:[%s208 + $0x1c] sm:$0xf] %vm380, %v371
      %s389 = smul.u32 8, %s19
      %p390 = scmp.lt.s32.totalorder %s18, 1
      %s391 = scalar_select %p390, %s18, 1
      %p392 = scmp.lt.s32.totalorder %s389, 7
      %s393 = scalar_select %p392, %s389, 7
      %s394 = smul.addr %s391, 8
      %s395 = sadd.s32 %s393, %s394
      %s396 = smul.addr %s395, 4
      %s397 = scalar_lea.vmem %s3, %s396
      // Predicated region
      $region33: #{tpu_custom_call.1} parent=31 // pred_check
        %p398 = pneg %p116
      $region34: #{tpu_custom_call.1} parent=31 // pred_check_branch
        %400 = sbr.rel (%p398) target = $region36
      $region35: #{tpu_custom_call.1} parent=31 // pred_region
        %s401 = smul.u32 8, %s19
      $region36: #{tpu_custom_call.1} parent=31 // pred_fallthru
        _
    $region32: #{tpu_custom_call.1} parent=5 // pred_fallthru
      _
    %p402 = scmp.le.s32.totalorder 2, %s9
    // Predicated region
    $region37: #{tpu_custom_call.1} parent=5 // pred_check
      %p403 = pneg %p402
    $region38: #{tpu_custom_call.1} parent=5 // pred_check_branch
      %405 = sbr.rel (%p403) target = $region40
    $region39: #{tpu_custom_call.1} parent=5 // pred_region
      %s406 = ssub.s32 %s9, 2
      // Predicated region
      $region41: #{tpu_custom_call.1} parent=39 // pred_check
        %p407 = pneg %p122
      $region42: #{tpu_custom_call.1} parent=39 // pred_check_branch
        %409 = sbr.rel (%p407) target = $region44
      $region43: #{tpu_custom_call.1} parent=39 // pred_region
        %s410 = smul.u32 8, %s21
        %p411 = scmp.lt.s32.totalorder %s20, 1
        %s412 = scalar_select %p411, %s20, 1
        %p413 = scmp.lt.s32.totalorder %s410, 7
        %s414 = scalar_select %p413, %s410, 7
        %s415 = smul.addr %s412, 8
        %s416 = sadd.s32 %s414, %s415
        %s417 = smul.addr %s416, 4
        %s418 = scalar_lea.vmem %s3, %s417
      $region44: #{tpu_custom_call.1} parent=39 // pred_fallthru
        _
    $region40: #{tpu_custom_call.1} parent=5 // pred_fallthru
      _
  $region6: #{tpu_custom_call.1} parent=0 // loop_footer
    %s13 = sadd.s32 1, %s9
  $region7: #{tpu_custom_call.1} parent=0 // loop_footer_branch
    %8 = sbr.rel target = $region3
  $region8: #{tpu_custom_call.1} parent=0 // loop_exit
    _

</llo_original>
